<compile_context>
chip_gen: v5e
topology: v5e:2x2
jax: 0.10.0
libtpu: 0.0.40
codegen_flags: <defaults>
</compile_context>

<pallas_src>
import jax
import jax.numpy as jnp
from jax import lax
from jax.experimental import pallas as pl
from jax.experimental.pallas import tpu as pltpu


def _round_up(a, b):
    return ((a + b - 1) // b) * b


def _vmem_capacity_bytes():
    """Device VMEM capacity, with a conservative (v7x-sized) fallback."""
    try:
        info = pltpu.get_tpu_info()
        cap = getattr(info, "vmem_capacity_bytes", None)
        if cap:
            return int(cap)
    except Exception:
        pass
    return 64 * 1024 * 1024  # conservative: v7x per-TensorCore VMEM


def _make_fnn_kernel(D, H, h_chunk, eps, mask_last):
    inv_d = 1.0 / float(D)

    def kernel(x_ref, w1_ref, b1_ref, w2_ref, params_ref, o_ref, acc_ref):
        k = pl.program_id(1)

        @pl.when(k == 0)
        def _init():
            acc_ref[...] = jnp.zeros_like(acc_ref)

        x = x_ref[...]  # native dtype — feed the MXU directly (no f32 up-cast)

        # Linear1 chunk + bias + ReLU (f32 accumulation on the MXU).
        hid = jnp.dot(x, w1_ref[...], preferred_element_type=jnp.float32)
        hid = jnp.maximum(hid + b1_ref[...], 0.0)

        if mask_last:
            # Last H-chunk may read padded (garbage) w1/b1/w2 data: zero both
            # the invalid hid columns and the invalid w2 rows so the padded
            # region contributes exactly 0 to the accumulator.
            col = lax.broadcasted_iota(jnp.int32, hid.shape, 1)
            hid = jnp.where(k * h_chunk + col < H, hid, 0.0)
            row = lax.broadcasted_iota(jnp.int32, w2_ref.shape, 0)
            w2v = jnp.where(k * h_chunk + row < H, w2_ref[...], 0.0)
        else:
            w2v = w2_ref[...]

        # Linear2 chunk, accumulated into the f32 VMEM scratch.
        acc_ref[...] += jnp.dot(hid.astype(w2_ref.dtype), w2v,
                                preferred_element_type=jnp.float32)

        @pl.when(k == pl.num_programs(1) - 1)
        def _finalize():
            p = params_ref[...]                     # (3, D) f32: [b2; gamma; beta]
            res = acc_ref[...] + p[0:1, :] + x.astype(jnp.float32)

            # One-pass LayerNorm statistics (f32): var = E[r^2] - mean^2.
            s1 = jnp.sum(res, axis=-1, keepdims=True)
            s2 = jnp.sum(res * res, axis=-1, keepdims=True)
            mean = s1 * inv_d
            var = s2 * inv_d - mean * mean
            inv = lax.rsqrt(var + eps)

            y = (res - mean) * inv * p[1:2, :] + p[2:3, :]
            o_ref[...] = y.astype(o_ref.dtype)

    return kernel


def fnn_forward(x, w1, b1, w2, b2, gamma, beta, *, eps=1e-5,
                max_block_rows=512, max_h_chunk=2048):
    """Fused FNN forward.

    x:     (M, D)
    w1:    (D, H)   b1: (H,)      -- linear1 (weights pre-transposed vs torch)
    w2:    (H, D)   b2: (D,)      -- linear2
    gamma: (D,)     beta: (D,)    -- LayerNorm affine params
    """
    M, D = x.shape
    H = w1.shape[1]
    assert w1.shape == (D, H) and w2.shape == (H, D)
    assert b1.shape == (H,) and b2.shape == (D,)
    assert gamma.shape == (D,) and beta.shape == (D,)

    it_x = jnp.dtype(x.dtype).itemsize
    it_w = jnp.dtype(w1.dtype).itemsize

    # ---- H chunking (keeps the (tm, H) intermediate and streamed weight
    # slices small enough for v7x's 64 MiB VMEM at large hidden dims). ----
    if H <= max_h_chunk:
        h_chunk, nk = H, 1
    else:
        h_chunk = max(128, (max_h_chunk // 128) * 128)
        nk = -(-H // h_chunk)
    mask_last = (H % h_chunk) != 0

    # ---- VMEM-aware row-block selection. ----
    cap = _vmem_capacity_bytes()
    usable = int(cap * 0.8)
    if nk == 1:
        resident = (D * H + H * D) * it_w + H * 4 + 3 * D * 4   # single-buffered
    else:
        resident = 2 * (D * h_chunk + h_chunk * D) * it_w + 2 * h_chunk * 4 + 3 * D * 4
    per_row = (2 * D * it_x            # x block, double-buffered
               + 2 * D * it_x          # out block, double-buffered
               + D * 4                 # f32 accumulator scratch
               + h_chunk * 4           # hid intermediate
               + 4 * D * 4)            # residual / LN temporaries
    row_budget = max(usable - resident - (8 << 20), per_row * 8)
    tm_cap = max(8, min(max_block_rows, (row_budget // per_row) // 8 * 8))

    if M < 16:
        tm = M                                      # single full-extent block
    else:
        # >= 2 row blocks so both v7x TensorCores get work via "parallel".
        target = _round_up((M + 1) // 2, 8)
        tm = max(8, min(tm_cap, target))

    grid = (pl.cdiv(M, tm), nk)

    # ---- Parameter packing: b1 as (1, H) f32; b2/gamma/beta as one (3, D). ----
    b1_f32 = b1.reshape(1, H).astype(jnp.float32)
    params = jnp.stack([b2.astype(jnp.float32),
                        gamma.astype(jnp.float32),
                        beta.astype(jnp.float32)], axis=0)     # (3, D) f32

    def _vmem_full():
        return pl.BlockSpec(memory_space=pltpu.MemorySpace.VMEM)

    if nk == 1:
        # Constant across the whole grid: keep fully VMEM resident,
        # single-buffered (no pipeline double-buffering of the weights).
        w1_spec = _vmem_full()
        b1_spec = _vmem_full()
        w2_spec = _vmem_full()
    else:
        # Stream K-slices of the weights along the (innermost) H axis.
        w1_spec = pl.BlockSpec((D, h_chunk), lambda i, k: (0, k))
        b1_spec = pl.BlockSpec((1, h_chunk), lambda i, k: (0, k))
        w2_spec = pl.BlockSpec((h_chunk, D), lambda i, k: (k, 0))

    # ---- Explicit VMEM budget (with headroom), clamped to device capacity. ----
    vmem_need = resident + tm * per_row + 3 * D * 4
    vmem_limit = int(min(usable, max(vmem_need * 5 // 4 + (4 << 20), 32 << 20)))

    cost = pl.CostEstimate(
        flops=int(4 * M * D * H + 10 * M * D),
        transcendentals=int(M),
        bytes_accessed=int(2 * M * D * it_x
                           + 2 * D * H * it_w
                           + (H + 3 * D) * 4),
    )

    return pl.pallas_call(
        _make_fnn_kernel(D, H, h_chunk, eps, mask_last),
        out_shape=jax.ShapeDtypeStruct((M, D), x.dtype),
        grid=grid,
        in_specs=[
            pl.BlockSpec((tm, D), lambda i, k: (i, 0)),   # x row block
            w1_spec,                                      # w1
            b1_spec,                                      # b1 (1, H) f32
            w2_spec,                                      # w2
            _vmem_full(),                                 # packed (3, D) params
        ],
        out_specs=pl.BlockSpec((tm, D), lambda i, k: (i, 0)),
        scratch_shapes=[pltpu.VMEM((tm, D), jnp.float32)],
        compiler_params=pltpu.CompilerParams(
            dimension_semantics=("parallel", "arbitrary"),
            vmem_limit_bytes=vmem_limit,
        ),
        cost_estimate=cost,
    )(x, w1, b1_f32, w2, params)


def fnn_reference(x, w1, b1, w2, b2, gamma, beta, eps=1e-5):
    """Pure-JAX reference matching the PyTorch module."""
    hid = jnp.maximum(x @ w1 + b1, 0.0)
    out = hid @ w2 + b2
    res = out + x
    mean = res.mean(axis=-1, keepdims=True)
    var = ((res - mean) ** 2).mean(axis=-1, keepdims=True)
    return (res - mean) / jnp.sqrt(var + eps) * gamma + beta


if __name__ == "__main__":
    # Small TPU-friendly shapes: 64 rows, input_dim=128, hidden=256.
    M, D, H = 64, 128, 256
    key = jax.random.PRNGKey(0)
    kx, kw1, kb1, kw2, kb2 = jax.random.split(key, 5)

    x = jax.random.normal(kx, (M, D), dtype=jnp.float32)
    # PyTorch nn.Linear-style init bounds; weights pre-transposed so the
    # kernel computes x @ w1 directly.
    bound1 = 1.0 / (D ** 0.5)
    bound2 = 1.0 / (H ** 0.5)
    w1 = jax.random.uniform(kw1, (D, H), jnp.float32, -bound1, bound1)
    b1 = jax.random.uniform(kb1, (H,), jnp.float32, -bound1, bound1)
    w2 = jax.random.uniform(kw2, (H, D), jnp.float32, -bound2, bound2)
    b2 = jax.random.uniform(kb2, (D,), jnp.float32, -bound2, bound2)
    gamma = jnp.ones((D,), jnp.float32)
    beta = jnp.zeros((D,), jnp.float32)

    y_ref = fnn_reference(x, w1, b1, w2, b2, gamma, beta)

    # 1) f32 path, single H chunk (weights fully VMEM-resident, single-buffered).
    y = jax.block_until_ready(fnn_forward(x, w1, b1, w2, b2, gamma, beta))
    assert y.shape == (M, D) and y.dtype == x.dtype
    assert bool(jnp.allclose(y, y_ref, atol=1e-4, rtol=1e-4)), (
        f"max abs diff = {float(jnp.max(jnp.abs(y - y_ref)))}"
    )

    # 2) Forced H-chunking path (exercises the streamed / accumulated variant).
    y_c = jax.block_until_ready(
        fnn_forward(x, w1, b1, w2, b2, gamma, beta, max_h_chunk=128))
    assert bool(jnp.allclose(y_c, y_ref, atol=1e-4, rtol=1e-4)), (
        f"max abs diff (chunked) = {float(jnp.max(jnp.abs(y_c - y_ref)))}"
    )

    # 3) bf16 path (native-dtype MXU operands, f32 accumulation) — loose check.
    cast = lambda a: a.astype(jnp.bfloat16)
    y_bf = jax.block_until_ready(
        fnn_forward(cast(x), cast(w1), cast(b1), cast(w2), b2, gamma, beta))
    assert y_bf.dtype == jnp.bfloat16
    assert bool(jnp.allclose(y_bf.astype(jnp.float32), y_ref, atol=0.25, rtol=0.05))

    print("KERNEL_OK")
</pallas_src>

<mosaic_0001>
module attributes {stable_mosaic.version = 11 : i64} {
  func.func @kernel(%arg0: i32, %arg1: i32, %arg2: memref<32x128xf32, #tpu.memory_space<vmem>>, %arg3: memref<128x256xf32, #tpu.memory_space<vmem>>, %arg4: memref<1x256xf32, #tpu.memory_space<vmem>>, %arg5: memref<256x128xf32, #tpu.memory_space<vmem>>, %arg6: memref<3x128xf32, #tpu.memory_space<vmem>>, %arg7: memref<32x128xf32, #tpu.memory_space<vmem>>, %arg8: memref<32x128xf32, #tpu.memory_space<vmem>>) attributes {dimension_semantics = [#tpu.dimension_semantics<parallel>, #tpu.dimension_semantics<arbitrary>], iteration_bounds = array<i64: 2, 1>, scalar_prefetch = 0 : i64, scratch_operands = 1 : i64, tpu.core_type = #tpu.core_type<tc>, window_params = [{transform_indices = @transform_0, window_bounds = array<i64: 32, 128>}, {pipeline_mode = #tpu.pipeline_mode<synchronous>, transform_indices = @transform_1, window_bounds = array<i64: 128, 256>}, {pipeline_mode = #tpu.pipeline_mode<synchronous>, transform_indices = @transform_2, window_bounds = array<i64: 1, 256>}, {pipeline_mode = #tpu.pipeline_mode<synchronous>, transform_indices = @transform_3, window_bounds = array<i64: 256, 128>}, {pipeline_mode = #tpu.pipeline_mode<synchronous>, transform_indices = @transform_4, window_bounds = array<i64: 3, 128>}, {transform_indices = @transform_5, window_bounds = array<i64: 32, 128>}]} {
    %c0_i32 = arith.constant 0 : i32
    %0 = arith.cmpi eq, %arg1, %c0_i32 : i32
    %1 = arith.extui %0 : i1 to i32
    %c0_i32_0 = arith.constant 0 : i32
    %2 = arith.cmpi ne, %1, %c0_i32_0 : i32
    scf.if %2 {
      %cst_16 = arith.constant 0.000000e+00 : f32
      %19 = vector.broadcast %cst_16 : f32 to vector<32x128xf32>
      %c0_17 = arith.constant 0 : index
      %c0_18 = arith.constant 0 : index
      %20 = vector.load %arg8[%c0_17, %c0_18] : memref<32x128xf32, #tpu.memory_space<vmem>>, vector<32x128xf32>
      tpu.vector_store %arg8[%c0_17, %c0_18], %19 {strides = array<i32>} : memref<32x128xf32, #tpu.memory_space<vmem>>, vector<32x128xf32>,
    } else {
    }
    %c0 = arith.constant 0 : index
    %c0_1 = arith.constant 0 : index
    %3 = vector.load %arg2[%c0, %c0_1] : memref<32x128xf32, #tpu.memory_space<vmem>>, vector<32x128xf32>
    %c0_2 = arith.constant 0 : index
    %c0_3 = arith.constant 0 : index
    %4 = vector.load %arg3[%c0_2, %c0_3] : memref<128x256xf32, #tpu.memory_space<vmem>>, vector<128x256xf32>
    %cst = arith.constant dense<0.000000e+00> : vector<32x256xf32>
    %5 = tpu.matmul %3, %4, %cst {dimension_numbers = #tpu.dot_dimension_numbers<[1], [0], [0], [1], [0, 0, 1, 1], [], []>} : vector<32x128xf32>, vector<128x256xf32>, vector<32x256xf32> -> vector<32x256xf32>
    %c0_4 = arith.constant 0 : index
    %c0_5 = arith.constant 0 : index
    %6 = vector.load %arg4[%c0_4, %c0_5] : memref<1x256xf32, #tpu.memory_space<vmem>>, vector<1x256xf32>
    %7 = vector.broadcast %6 : vector<1x256xf32> to vector<32x256xf32>
    %8 = arith.addf %5, %7 : vector<32x256xf32>
    %cst_6 = arith.constant 0.000000e+00 : f32
    %9 = vector.broadcast %cst_6 : f32 to vector<32x256xf32>
    %10 = arith.maximumf %8, %9 : vector<32x256xf32>
    %c0_7 = arith.constant 0 : index
    %c0_8 = arith.constant 0 : index
    %11 = vector.load %arg5[%c0_7, %c0_8] : memref<256x128xf32, #tpu.memory_space<vmem>>, vector<256x128xf32>
    %c0_9 = arith.constant 0 : index
    %c0_10 = arith.constant 0 : index
    %12 = vector.load %arg8[%c0_9, %c0_10] : memref<32x128xf32, #tpu.memory_space<vmem>>, vector<32x128xf32>
    %cst_11 = arith.constant dense<0.000000e+00> : vector<32x128xf32>
    %13 = tpu.matmul %10, %11, %cst_11 {dimension_numbers = #tpu.dot_dimension_numbers<[1], [0], [0], [1], [0, 0, 1, 1], [], []>} : vector<32x256xf32>, vector<256x128xf32>, vector<32x128xf32> -> vector<32x128xf32>
    %14 = arith.addf %12, %13 : vector<32x128xf32>
    %c0_12 = arith.constant 0 : index
    %c0_13 = arith.constant 0 : index
    %15 = vector.load %arg8[%c0_12, %c0_13] : memref<32x128xf32, #tpu.memory_space<vmem>>, vector<32x128xf32>
    tpu.vector_store %arg8[%c0_12, %c0_13], %14 {strides = array<i32>} : memref<32x128xf32, #tpu.memory_space<vmem>>, vector<32x128xf32>,
    %c0_i32_14 = arith.constant 0 : i32
    %16 = arith.cmpi eq, %arg1, %c0_i32_14 : i32
    %17 = arith.extui %16 : i1 to i32
    %c0_i32_15 = arith.constant 0 : i32
    %18 = arith.cmpi ne, %17, %c0_i32_15 : i32
    scf.if %18 {
      %c0_16 = arith.constant 0 : index
      %c0_17 = arith.constant 0 : index
      %19 = vector.load %arg6[%c0_16, %c0_17] : memref<3x128xf32, #tpu.memory_space<vmem>>, vector<3x128xf32>
      %c0_18 = arith.constant 0 : index
      %c0_19 = arith.constant 0 : index
      %20 = vector.load %arg8[%c0_18, %c0_19] : memref<32x128xf32, #tpu.memory_space<vmem>>, vector<32x128xf32>
      %21 = vector.extract_strided_slice %19 {offsets = [0, 0], sizes = [1, 128], strides = [1, 1]} : vector<3x128xf32> to vector<1x128xf32>
      %22 = vector.broadcast %21 : vector<1x128xf32> to vector<32x128xf32>
      %23 = arith.addf %20, %22 : vector<32x128xf32>
      %24 = arith.addf %23, %3 : vector<32x128xf32>
      %cst_20 = arith.constant dense<0.000000e+00> : vector<32xf32>
      %25 = vector.multi_reduction <add>, %24, %cst_20 [1] : vector<32x128xf32> to vector<32xf32>
      %26 = vector.shape_cast %25 : vector<32xf32> to vector<32x1xf32>
      %27 = arith.mulf %24, %24 : vector<32x128xf32>
      %cst_21 = arith.constant dense<0.000000e+00> : vector<32xf32>
      %28 = vector.multi_reduction <add>, %27, %cst_21 [1] : vector<32x128xf32> to vector<32xf32>
      %29 = vector.shape_cast %28 : vector<32xf32> to vector<32x1xf32>
      %cst_22 = arith.constant 7.812500e-03 : f32
      %30 = vector.broadcast %cst_22 : f32 to vector<32x1xf32>
      %31 = arith.mulf %26, %30 : vector<32x1xf32>
      %cst_23 = arith.constant 7.812500e-03 : f32
      %32 = vector.broadcast %cst_23 : f32 to vector<32x1xf32>
      %33 = arith.mulf %29, %32 : vector<32x1xf32>
      %34 = arith.mulf %31, %31 : vector<32x1xf32>
      %35 = arith.subf %33, %34 : vector<32x1xf32>
      %cst_24 = arith.constant 9.99999974E-6 : f32
      %36 = vector.broadcast %cst_24 : f32 to vector<32x1xf32>
      %37 = arith.addf %35, %36 : vector<32x1xf32>
      %38 = math.rsqrt %37 : vector<32x1xf32>
      %39 = vector.broadcast %31 : vector<32x1xf32> to vector<32x128xf32>
      %40 = arith.subf %24, %39 : vector<32x128xf32>
      %41 = vector.broadcast %38 : vector<32x1xf32> to vector<32x128xf32>
      %42 = arith.mulf %40, %41 : vector<32x128xf32>
      %43 = vector.extract_strided_slice %19 {offsets = [1, 0], sizes = [1, 128], strides = [1, 1]} : vector<3x128xf32> to vector<1x128xf32>
      %44 = vector.broadcast %43 : vector<1x128xf32> to vector<32x128xf32>
      %45 = arith.mulf %42, %44 : vector<32x128xf32>
      %46 = vector.extract_strided_slice %19 {offsets = [2, 0], sizes = [1, 128], strides = [1, 1]} : vector<3x128xf32> to vector<1x128xf32>
      %47 = vector.broadcast %46 : vector<1x128xf32> to vector<32x128xf32>
      %48 = arith.addf %45, %47 : vector<32x128xf32>
      %c0_25 = arith.constant 0 : index
      %c0_26 = arith.constant 0 : index
      %49 = vector.load %arg7[%c0_25, %c0_26] : memref<32x128xf32, #tpu.memory_space<vmem>>, vector<32x128xf32>
      tpu.vector_store %arg7[%c0_25, %c0_26], %48 {strides = array<i32>} : memref<32x128xf32, #tpu.memory_space<vmem>>, vector<32x128xf32>,
    } else {
    }
    return
  }
  func.func @transform_0(%arg0: i32, %arg1: i32) -> (i32, i32) {
    %c0_i32 = arith.constant 0 : i32
    %c0_i32_0 = arith.constant 0 : i32
    return %arg0, %c0_i32 : i32, i32
  }
  func.func @transform_1(%arg0: i32, %arg1: i32) -> (i32, i32) {
    %c0_i32 = arith.constant 0 : i32
    %c0_i32_0 = arith.constant 0 : i32
    %c0_i32_1 = arith.constant 0 : i32
    return %c0_i32, %c0_i32_0 : i32, i32
  }
  func.func @transform_2(%arg0: i32, %arg1: i32) -> (i32, i32) {
    %c0_i32 = arith.constant 0 : i32
    %c0_i32_0 = arith.constant 0 : i32
    %c0_i32_1 = arith.constant 0 : i32
    return %c0_i32, %c0_i32_0 : i32, i32
  }
  func.func @transform_3(%arg0: i32, %arg1: i32) -> (i32, i32) {
    %c0_i32 = arith.constant 0 : i32
    %c0_i32_0 = arith.constant 0 : i32
    %c0_i32_1 = arith.constant 0 : i32
    return %c0_i32, %c0_i32_0 : i32, i32
  }
  func.func @transform_4(%arg0: i32, %arg1: i32) -> (i32, i32) {
    %c0_i32 = arith.constant 0 : i32
    %c0_i32_0 = arith.constant 0 : i32
    %c0_i32_1 = arith.constant 0 : i32
    return %c0_i32, %c0_i32_0 : i32, i32
  }
  func.func @transform_5(%arg0: i32, %arg1: i32) -> (i32, i32) {
    %c0_i32 = arith.constant 0 : i32
    %c0_i32_0 = arith.constant 0 : i32
    return %arg0, %c0_i32 : i32, i32
  }
}

</mosaic_0001>

<llo_original>
// kernel: tpu_custom_call.1
$region0: #{tpu_custom_call.1}
  #allocation0 [shape = 'u32[]', space=smem, size = 0x4, offset = 0x4, fixed_abs, tag = 'smem constant byte address 0x4 - core index']
  #allocation1 [shape = 'u32[72,128]{1,0:T(1,128)}', space=vmem, size = 0x9000, scoped, tag = 'internal scratch']
  #allocation2 [shape = 'f32[32,128]{1,0:T(8,128)}', space=vmem, size = 0x4000, scoped, tag = 'scratch operand']
  %s0 = inlined_call_operand.hbm [shape: f32[64,128], index: 0, kind: input, shape index: {}]
  %s1 = inlined_call_operand.hbm [shape: f32[128,256], index: 1, kind: input, shape index: {}]
  %s2 = inlined_call_operand.hbm [shape: f32[1,256], index: 2, kind: input, shape index: {}]
  %s3 = inlined_call_operand.hbm [shape: f32[256,128], index: 3, kind: input, shape index: {}]
  %s4 = inlined_call_operand.hbm [shape: f32[3,128], index: 4, kind: input, shape index: {}]
  %s5 = inlined_call_operand.hbm [shape: f32[64,128], index: 5, kind: output, shape index: {}]
  %s6 = sld [smem:[#allocation0]]
  $region81: #{tpu_custom_call.1} parent=0
    _
  %s8 = ssub.s32 1, %s6
  %s9 = scalar_select 0, %s8, %s6
  $region1: #{tpu_custom_call.1} parent=0
    #allocation3 [shape = 'u8[32768]{0}', space=vmem, size = 0x8000, scoped, tag = 'input window, operand 0']
    #allocation4 [shape = 's32[2]{0}', space=sflag, size = 0x8, scoped, tag = 'scoped memory for tpu_custom_call.1']
    #allocation5 [shape = 's32[2]{0}', space=sflag, size = 0x8, scoped, tag = 'scoped memory for tpu_custom_call.1']
    #allocation6 [shape = 'u8[131072]{0}', space=vmem, size = 0x20000, scoped, tag = 'input window, operand 1, single buffered']
    #allocation7 [shape = 's32[1]{0}', space=sflag, size = 0x4, scoped, tag = 'scoped memory for tpu_custom_call.1']
    #allocation8 [shape = 'u8[1024]{0}', space=vmem, size = 0x400, scoped, tag = 'input window, operand 2, single buffered']
    #allocation9 [shape = 'u8[131072]{0}', space=vmem, size = 0x20000, scoped, tag = 'input window, operand 3, single buffered']
    #allocation10 [shape = 's32[1]{0}', space=sflag, size = 0x4, scoped, tag = 'scoped memory for tpu_custom_call.1']
    #allocation11 [shape = 'u8[2048]{0}', space=vmem, size = 0x800, scoped, tag = 'input window, operand 4, single buffered']
    #allocation12 [shape = 'u8[32768]{0}', space=vmem, size = 0x8000, scoped, tag = 'output window, operand 0']
    %10 = vsyncpa [#allocation4], 0
    %s11 = scalar_lea.sflag [#allocation4], 1
    %12 = vsyncpa %s11, 0
    %13 = vsyncpa [#allocation7], 0
    %14 = vsyncpa [#allocation10], 0
    %15 = vsyncpa [#allocation5], 0
    %s16 = scalar_lea.sflag [#allocation5], 1
    %17 = vsyncpa %s16, 0
    loop: start=0, step=1, limit=4
    $region2: #{tpu_custom_call.1} parent=1 // loop_pre_header
      _
    $region3: #{tpu_custom_call.1} parent=1 // loop_header
      %s19 = sphi 0, %s23
      %p20 = scmp.ge.s32.totalorder %s19, 4
      %s26 = sphi 0, %s38
      %s27 = sphi 0, %s34
      %s28 = sphi 0, %s26
      %s29 = sphi 0, %s27
      %s30 = sphi 0, %s28
      %s31 = sphi 0, %s29
      %s41 = sphi 0, %s43
      %s44 = sphi 0, %s41
      %s45 = sphi 0, %s44
      %s61 = sphi 0, %s45
      %s65 = sphi 0, %s65
      %s67 = sphi 0, %s65
      %s68 = sphi 0, %s67
      %s82 = sphi 0, %s68
      %s86 = sphi 0, %s86
      %s88 = sphi 0, %s86
      %s89 = sphi 0, %s88
      %s103 = sphi 0, %s89
      %s107 = sphi 0, %s107
      %s109 = sphi 0, %s107
      %s110 = sphi 0, %s109
      %s124 = sphi 0, %s110
      %s128 = sphi 0, %s128
      %s130 = sphi 0, %s128
      %s131 = sphi 0, %s130
      %s145 = sphi 0, %s131
      %s151 = sphi 0, %s153
      %s154 = sphi 0, %s151
      %s155 = sphi 0, %s154
      %s171 = sphi 0, %s155
    $region4: #{tpu_custom_call.1} parent=1 // loop_header_branch
      %22 = sbr.rel (%p20) target = $region8
    $region5: #{tpu_custom_call.1} parent=1 // loop_body
      %s24 = ssub.s32 %s19, 1
      %s25 = ssub.s32 %s19, 2
      %s32 = sadd.s32 1, %s27
      %p33 = scmp.ge.s32.totalorder %s32, 1
      %s34 = scalar_select %p33, 0, %s32
      %s35 = sadd.s32 1, %s26
      %s36 = scalar_select %p33, %s35, %s26
      %p37 = scmp.ge.s32.totalorder %s36, 2
      %s38 = scalar_select %p37, 0, %s36
      %s39 = ssub.s32 %s26, %s38
      %p40 = scmp.eq.s32.totalorder %s39, 0
      %s42 = sadd.s32 %s41, 1
      %s43 = scalar_select %p40, %s41, %s42
      %p46 = pneg %p40
      %p47 = scmp.eq.s32.totalorder %s19, 1
      %p48 = por %p46, %p47
      %p49 = scmp.ne.s32.totalorder %s41, %s44
      %p50 = scmp.eq.s32.totalorder %s19, 0
      %p51 = por %p49, %p50
      %p52 = scmp.ne.s32.totalorder %s41, %s44
      %p53 = scmp.eq.s32.totalorder %s24, 1
      %p54 = por %p52, %p53
      %p55 = scmp.ne.s32.totalorder %s44, %s45
      %p56 = scmp.eq.s32.totalorder %s24, 0
      %p57 = por %p55, %p56
      %p58 = scmp.ne.s32.totalorder %s44, %s45
      %p59 = scmp.eq.s32.totalorder %s25, 1
      %p60 = por %p58, %p59
      %p62 = scmp.ne.s32.totalorder %s45, %s61
      %p63 = scmp.eq.s32.totalorder %s25, 0
      %p64 = por %p62, %p63
      %s66 = sadd.s32 %s65, 1
      %p69 = scmp.eq.s32.totalorder %s19, 1
      %p70 = scmp.ne.s32.totalorder %s65, %s67
      %p71 = scmp.eq.s32.totalorder %s19, 0
      %p72 = por %p70, %p71
      %p73 = scmp.ne.s32.totalorder %s65, %s67
      %p74 = scmp.eq.s32.totalorder %s24, 1
      %p75 = por %p73, %p74
      %p76 = scmp.ne.s32.totalorder %s67, %s68
      %p77 = scmp.eq.s32.totalorder %s24, 0
      %p78 = por %p76, %p77
      %p79 = scmp.ne.s32.totalorder %s67, %s68
      %p80 = scmp.eq.s32.totalorder %s25, 1
      %p81 = por %p79, %p80
      %p83 = scmp.ne.s32.totalorder %s68, %s82
      %p84 = scmp.eq.s32.totalorder %s25, 0
      %p85 = por %p83, %p84
      %s87 = sadd.s32 %s86, 1
      %p90 = scmp.eq.s32.totalorder %s19, 1
      %p91 = scmp.ne.s32.totalorder %s86, %s88
      %p92 = scmp.eq.s32.totalorder %s19, 0
      %p93 = por %p91, %p92
      %p94 = scmp.ne.s32.totalorder %s86, %s88
      %p95 = scmp.eq.s32.totalorder %s24, 1
      %p96 = por %p94, %p95
      %p97 = scmp.ne.s32.totalorder %s88, %s89
      %p98 = scmp.eq.s32.totalorder %s24, 0
      %p99 = por %p97, %p98
      %p100 = scmp.ne.s32.totalorder %s88, %s89
      %p101 = scmp.eq.s32.totalorder %s25, 1
      %p102 = por %p100, %p101
      %p104 = scmp.ne.s32.totalorder %s89, %s103
      %p105 = scmp.eq.s32.totalorder %s25, 0
      %p106 = por %p104, %p105
      %s108 = sadd.s32 %s107, 1
      %p111 = scmp.eq.s32.totalorder %s19, 1
      %p112 = scmp.ne.s32.totalorder %s107, %s109
      %p113 = scmp.eq.s32.totalorder %s19, 0
      %p114 = por %p112, %p113
      %p115 = scmp.ne.s32.totalorder %s107, %s109
      %p116 = scmp.eq.s32.totalorder %s24, 1
      %p117 = por %p115, %p116
      %p118 = scmp.ne.s32.totalorder %s109, %s110
      %p119 = scmp.eq.s32.totalorder %s24, 0
      %p120 = por %p118, %p119
      %p121 = scmp.ne.s32.totalorder %s109, %s110
      %p122 = scmp.eq.s32.totalorder %s25, 1
      %p123 = por %p121, %p122
      %p125 = scmp.ne.s32.totalorder %s110, %s124
      %p126 = scmp.eq.s32.totalorder %s25, 0
      %p127 = por %p125, %p126
      %s129 = sadd.s32 %s128, 1
      %p132 = scmp.eq.s32.totalorder %s19, 1
      %p133 = scmp.ne.s32.totalorder %s128, %s130
      %p134 = scmp.eq.s32.totalorder %s19, 0
      %p135 = por %p133, %p134
      %p136 = scmp.ne.s32.totalorder %s128, %s130
      %p137 = scmp.eq.s32.totalorder %s24, 1
      %p138 = por %p136, %p137
      %p139 = scmp.ne.s32.totalorder %s130, %s131
      %p140 = scmp.eq.s32.totalorder %s24, 0
      %p141 = por %p139, %p140
      %p142 = scmp.ne.s32.totalorder %s130, %s131
      %p143 = scmp.eq.s32.totalorder %s25, 1
      %p144 = por %p142, %p143
      %p146 = scmp.ne.s32.totalorder %s131, %s145
      %p147 = scmp.eq.s32.totalorder %s25, 0
      %p148 = por %p146, %p147
      %s149 = ssub.s32 %s26, %s38
      %p150 = scmp.eq.s32.totalorder %s149, 0
      %s152 = sadd.s32 %s151, 1
      %s153 = scalar_select %p150, %s151, %s152
      %p156 = pneg %p150
      %p157 = scmp.eq.s32.totalorder %s19, 1
      %p158 = por %p156, %p157
      %p159 = scmp.ne.s32.totalorder %s151, %s154
      %p160 = scmp.eq.s32.totalorder %s19, 0
      %p161 = por %p159, %p160
      %p162 = scmp.ne.s32.totalorder %s151, %s154
      %p163 = scmp.eq.s32.totalorder %s24, 1
      %p164 = por %p162, %p163
      %p165 = scmp.ne.s32.totalorder %s154, %s155
      %p166 = scmp.eq.s32.totalorder %s24, 0
      %p167 = por %p165, %p166
      %p168 = scmp.ne.s32.totalorder %s154, %s155
      %p169 = scmp.eq.s32.totalorder %s25, 1
      %p170 = por %p168, %p169
      %p172 = scmp.ne.s32.totalorder %s155, %s171
      %p173 = scmp.eq.s32.totalorder %s25, 0
      %p174 = por %p172, %p173
      %p175 = scmp.le.s32.totalorder 1, %s19
      %p176 = scmp.lt.s32.totalorder %s19, 3
      %p177 = pnand %p175, %p176
      %p178 = pneg %p177
      // Predicated region
      $region9: #{tpu_custom_call.1} parent=5 // pred_check
        _
      $region10: #{tpu_custom_call.1} parent=5 // pred_check_branch
        %180 = sbr.rel (%p177) target = $region12
      $region11: #{tpu_custom_call.1} parent=5 // pred_region
        %s181 = ssub.s32 %s19, 1
        // Predicated region
        $region13: #{tpu_custom_call.1} parent=11 // pred_check
          %p182 = pneg %p78
        $region14: #{tpu_custom_call.1} parent=11 // pred_check_branch
          %184 = sbr.rel (%p182) target = $region16
        $region15: #{tpu_custom_call.1} parent=11 // pred_region
          %186 = vsyncadd [#allocation7], 0
          %s187 = sshll.u32 %s1, 4
          %s188 = int_to_ptr.hbm [resolvable:$true] %s187
          %s189 = sshll.u32 [#allocation6], 4
          %s190 = int_to_ptr.vmem [resolvable:$true] %s189
          %195 = dma.hbm_to_vmem [thread:$0]  %s188, 4096, %s190, [#allocation7], 256, 256, 16
        $region16: #{tpu_custom_call.1} parent=11 // pred_fallthru
          _
        // Predicated region
        $region17: #{tpu_custom_call.1} parent=11 // pred_check
          %p196 = pneg %p99
        $region18: #{tpu_custom_call.1} parent=11 // pred_check_branch
          %198 = sbr.rel (%p196) target = $region20
        $region19: #{tpu_custom_call.1} parent=11 // pred_region
          %200 = vsyncadd [#allocation7], 0
          %s202 = sshll.u32 %s2, 4
          %s203 = int_to_ptr.hbm [resolvable:$true] %s202
          %s204 = sshll.u32 [#allocation8], 4
          %s205 = int_to_ptr.vmem [resolvable:$true] %s204
          %207 = dma.hbm_to_vmem [thread:$0]  %s203, 32, %s205, [#allocation7]
        $region20: #{tpu_custom_call.1} parent=11 // pred_fallthru
          _
        // Predicated region
        $region21: #{tpu_custom_call.1} parent=11 // pred_check
          %p208 = pneg %p120
        $region22: #{tpu_custom_call.1} parent=11 // pred_check_branch
          %210 = sbr.rel (%p208) target = $region24
        $region23: #{tpu_custom_call.1} parent=11 // pred_region
          %212 = vsyncadd [#allocation10], 0
          %s213 = sshll.u32 %s3, 4
          %s214 = int_to_ptr.hbm [resolvable:$true] %s213
          %s215 = sshll.u32 [#allocation9], 4
          %s216 = int_to_ptr.vmem [resolvable:$true] %s215
          %221 = dma.hbm_to_vmem [thread:$0]  %s214, 4096, %s216, [#allocation10], 128, 128, 8
        $region24: #{tpu_custom_call.1} parent=11 // pred_fallthru
          _
        // Predicated region
        $region25: #{tpu_custom_call.1} parent=11 // pred_check
          %p222 = pneg %p141
        $region26: #{tpu_custom_call.1} parent=11 // pred_check_branch
          %224 = sbr.rel (%p222) target = $region28
        $region27: #{tpu_custom_call.1} parent=11 // pred_region
          %226 = vsyncadd [#allocation10], 0
          %s228 = sshll.u32 %s4, 4
          %s229 = int_to_ptr.hbm [resolvable:$true] %s228
          %s230 = sshll.u32 [#allocation11], 4
          %s231 = int_to_ptr.vmem [resolvable:$true] %s230
          %233 = dma.hbm_to_vmem [thread:$0]  %s229, 64, %s231, [#allocation10]
        $region28: #{tpu_custom_call.1} parent=11 // pred_fallthru
          _
      $region12: #{tpu_custom_call.1} parent=5 // pred_fallthru
        _
      %p234 = scmp.lt.s32.totalorder %s19, 2
      // Predicated region
      $region29: #{tpu_custom_call.1} parent=5 // pred_check
        %p235 = pneg %p234
      $region30: #{tpu_custom_call.1} parent=5 // pred_check_branch
        %237 = sbr.rel (%p235) target = $region32
      $region31: #{tpu_custom_call.1} parent=5 // pred_region
        // Predicated region
        $region33: #{tpu_custom_call.1} parent=31 // pred_check
          %p238 = pneg %p51
        $region34: #{tpu_custom_call.1} parent=31 // pred_check_branch
          %240 = sbr.rel (%p238) target = $region36
        $region35: #{tpu_custom_call.1} parent=31 // pred_region
          %s241 = sand.u32 %s41, 1
          %s242 = scalar_lea.sflag [#allocation4], %s241
          %s243 = sand.u32 %s41, 1
          %s244 = smul.addr %s243, 32
          %s245 = scalar_lea.vmem [#allocation3], %s244
          %s246 = smul.u32 4, %s26
          %248 = vsyncadd %s242, 0
          %s249 = smul.addr %s246, 8
          %s250 = scalar_lea.hbm %s0, %s249
          %s251 = sshll.u32 %s250, 4
          %s252 = int_to_ptr.hbm [resolvable:$true] %s251
          %s253 = sshll.u32 %s245, 4
          %s254 = int_to_ptr.vmem [resolvable:$true] %s253
          %259 = dma.hbm_to_vmem [thread:$0]  %s252, 512, %s254, %s242, 128, 128, 8
        $region36: #{tpu_custom_call.1} parent=31 // pred_fallthru
          _
      $region32: #{tpu_custom_call.1} parent=5 // pred_fallthru
        _
      %p260 = scmp.le.s32.totalorder 1, %s19
      %p261 = scmp.lt.s32.totalorder %s19, 3
      %p262 = pnand %p260, %p261
      %p263 = pneg %p262
      // Predicated region
      $region37: #{tpu_custom_call.1} parent=5 // pred_check
        _
      $region38: #{tpu_custom_call.1} parent=5 // pred_check_branch
        %265 = sbr.rel (%p262) target = $region40
      $region39: #{tpu_custom_call.1} parent=5 // pred_region
        %s266 = ssub.s32 %s19, 1
        %s267 = sand.u32 %s44, 1
        %s268 = scalar_lea.sflag [#allocation4], %s267
        %s269 = sand.u32 %s44, 1
        %s270 = smul.addr %s269, 32
        %s271 = scalar_lea.vmem [#allocation3], %s270
        // Predicated region
        $region41: #{tpu_custom_call.1} parent=39 // pred_check
          %p272 = pneg %p57
        $region42: #{tpu_custom_call.1} parent=39 // pred_check_branch
          %274 = sbr.rel (%p272) target = $region44
        $region43: #{tpu_custom_call.1} parent=39 // pred_region
          %276 = dma.done %s268, 512
        $region44: #{tpu_custom_call.1} parent=39 // pred_fallthru
          _
        // Predicated region
        $region45: #{tpu_custom_call.1} parent=39 // pred_check
          %p277 = pneg %p78
        $region46: #{tpu_custom_call.1} parent=39 // pred_check_branch
          %279 = sbr.rel (%p277) target = $region48
        $region47: #{tpu_custom_call.1} parent=39 // pred_region
          %281 = dma.done [#allocation7], 4096
        $region48: #{tpu_custom_call.1} parent=39 // pred_fallthru
          _
        // Predicated region
        $region49: #{tpu_custom_call.1} parent=39 // pred_check
          %p282 = pneg %p99
        $region50: #{tpu_custom_call.1} parent=39 // pred_check_branch
          %284 = sbr.rel (%p282) target = $region52
        $region51: #{tpu_custom_call.1} parent=39 // pred_region
          %286 = dma.done [#allocation7], 32
        $region52: #{tpu_custom_call.1} parent=39 // pred_fallthru
          _
        // Predicated region
        $region53: #{tpu_custom_call.1} parent=39 // pred_check
          %p287 = pneg %p120
        $region54: #{tpu_custom_call.1} parent=39 // pred_check_branch
          %289 = sbr.rel (%p287) target = $region56
        $region55: #{tpu_custom_call.1} parent=39 // pred_region
          %291 = dma.done [#allocation10], 4096
        $region56: #{tpu_custom_call.1} parent=39 // pred_fallthru
          _
        // Predicated region
        $region57: #{tpu_custom_call.1} parent=39 // pred_check
          %p292 = pneg %p141
        $region58: #{tpu_custom_call.1} parent=39 // pred_check_branch
          %294 = sbr.rel (%p292) target = $region60
        $region59: #{tpu_custom_call.1} parent=39 // pred_region
          %296 = dma.done [#allocation10], 64
        $region60: #{tpu_custom_call.1} parent=39 // pred_fallthru
          _
        %s297 = sand.u32 %s44, 1
        %s298 = scalar_lea.sflag [#allocation4], %s297
        %s299 = sand.u32 %s44, 1
        %s300 = smul.addr %s299, 32
        %s301 = scalar_lea.vmem [#allocation3], %s300
        %p302 = pneg %p57
        %p303 = pneg %p54
        %p304 = pneg %p78
        %p305 = pneg %p75
        %p306 = pneg %p99
        %p307 = pneg %p96
        %p308 = pneg %p120
        %p309 = pneg %p117
        %p310 = pneg %p141
        %p311 = pneg %p138
        %p312 = pneg %p167
        %p313 = pneg %p164
        %s314 = sand.u32 %s154, 1
        %s315 = scalar_lea.sflag [#allocation5], %s314
        %s316 = sand.u32 %s154, 1
        %s317 = smul.addr %s316, 32
        %s318 = scalar_lea.vmem [#allocation12], %s317
        %s319 = smul.u32 4, %s28
        %s320 = smul.u32 4, %s28
        %p321 = scmp.eq.s32.totalorder %s29, 0
        // Predicated region
        $region61: #{tpu_custom_call.1} parent=39 // pred_check
          %p322 = pneg %p321
        $region62: #{tpu_custom_call.1} parent=39 // pred_check_branch
          %324 = sbr.rel (%p322) target = $region64
        $region63: #{tpu_custom_call.1} parent=39 // pred_region
          %325 = vst [vmem:[#allocation2] sm:$0xff] 0.0
          %326 = vst [vmem:[#allocation2 + $0x8] sm:$0xff] 0.0
          %327 = vst [vmem:[#allocation2 + $0x10] sm:$0xff] 0.0
          %328 = vst [vmem:[#allocation2 + $0x18] sm:$0xff] 0.0
        $region64: #{tpu_custom_call.1} parent=39 // pred_fallthru
          _
        %v329 = vld [vmem:[%s271] sm:$0xff]
        %v330 = vld [vmem:[%s271 + $0x8] sm:$0xff]
        %v331 = vld [vmem:[%s271 + $0x10] sm:$0xff]
        %v332 = vld [vmem:[%s271 + $0x18] sm:$0xff]
        %v333 = vld [vmem:[#allocation6] sm:$0xff]
        %v334 = vld [vmem:[#allocation6 + $0x8] sm:$0xff]
        %v335 = vld [vmem:[#allocation6 + $0x10] sm:$0xff]
        %v336 = vld [vmem:[#allocation6 + $0x18] sm:$0xff]
        %v337 = vld [vmem:[#allocation6 + $0x20] sm:$0xff]
        %v338 = vld [vmem:[#allocation6 + $0x28] sm:$0xff]
        %v339 = vld [vmem:[#allocation6 + $0x30] sm:$0xff]
        %v340 = vld [vmem:[#allocation6 + $0x38] sm:$0xff]
        %v341 = vld [vmem:[#allocation6 + $0x40] sm:$0xff]
        %v342 = vld [vmem:[#allocation6 + $0x48] sm:$0xff]
        %v343 = vld [vmem:[#allocation6 + $0x50] sm:$0xff]
        %v344 = vld [vmem:[#allocation6 + $0x58] sm:$0xff]
        %v345 = vld [vmem:[#allocation6 + $0x60] sm:$0xff]
        %v346 = vld [vmem:[#allocation6 + $0x68] sm:$0xff]
        %v347 = vld [vmem:[#allocation6 + $0x70] sm:$0xff]
        %v348 = vld [vmem:[#allocation6 + $0x78] sm:$0xff]
        %v349 = vld [vmem:[#allocation6 + $0x80] sm:$0xff]
        %v350 = vld [vmem:[#allocation6 + $0x88] sm:$0xff]
        %v351 = vld [vmem:[#allocation6 + $0x90] sm:$0xff]
        %v352 = vld [vmem:[#allocation6 + $0x98] sm:$0xff]
        %v353 = vld [vmem:[#allocation6 + $0xa0] sm:$0xff]
        %v354 = vld [vmem:[#allocation6 + $0xa8] sm:$0xff]
        %v355 = vld [vmem:[#allocation6 + $0xb0] sm:$0xff]
        %v356 = vld [vmem:[#allocation6 + $0xb8] sm:$0xff]
        %v357 = vld [vmem:[#allocation6 + $0xc0] sm:$0xff]
        %v358 = vld [vmem:[#allocation6 + $0xc8] sm:$0xff]
        %v359 = vld [vmem:[#allocation6 + $0xd0] sm:$0xff]
        %v360 = vld [vmem:[#allocation6 + $0xd8] sm:$0xff]
        %v361 = vld [vmem:[#allocation6 + $0xe0] sm:$0xff]
        %v362 = vld [vmem:[#allocation6 + $0xe8] sm:$0xff]
        %v363 = vld [vmem:[#allocation6 + $0xf0] sm:$0xff]
        %v364 = vld [vmem:[#allocation6 + $0xf8] sm:$0xff]
        %v365 = vld [vmem:[#allocation8] sm:$0x3]
        %v367 = vperm.slane %v365, 0
        %v368 = vperm.slane %v365, 1
        %371 = vmatpush.msra.mxu0 %v363
        %372 = vmatpush.msra.mxu0 %v361
        %373 = vmatpush.msra.mxu0 %v359
        %374 = vmatpush.msra.mxu0 %v357
        %375 = vmatpush.msra.mxu0 %v355
        %376 = vmatpush.msra.mxu0 %v353
        %377 = vmatpush.msra.mxu0 %v351
        %378 = vmatpush.msra.mxu0 %v349
        %379 = vmatpush.msra.mxu0 %v347
        %380 = vmatpush.msra.mxu0 %v345
        %381 = vmatpush.msra.mxu0 %v343
        %382 = vmatpush.msra.mxu0 %v341
        %383 = vmatpush.msra.mxu0 %v339
        %384 = vmatpush.msra.mxu0 %v337
        %385 = vmatpush.msra.mxu0 %v335
        %386 = vmatpush.msra.mxu0 %v333
        %387 = vmatmul.f32.gmra.mxu0 %v329
        %v388 = vpop.f32.mrf.mxu0
        %v389 = vadd.f32 %v367, %v388
        %390 = vmatmul.f32.gmra.mxu0 %v330
        %v391 = vpop.f32.mrf.mxu0
        %v392 = vadd.f32 %v367, %v391
        %393 = vmatmul.f32.gmra.mxu0 %v331
        %v394 = vpop.f32.mrf.mxu0
        %v395 = vadd.f32 %v367, %v394
        %396 = vmatmul.f32.gmra.mxu0 %v332
        %v397 = vpop.f32.mrf.mxu0
        %v398 = vadd.f32 %v367, %v397
        %399 = vdwg.mxu0
        %400 = vmatpush.msra.mxu0 %v364
        %401 = vmatpush.msra.mxu0 %v362
        %402 = vmatpush.msra.mxu0 %v360
        %403 = vmatpush.msra.mxu0 %v358
        %404 = vmatpush.msra.mxu0 %v356
        %405 = vmatpush.msra.mxu0 %v354
        %406 = vmatpush.msra.mxu0 %v352
        %407 = vmatpush.msra.mxu0 %v350
        %408 = vmatpush.msra.mxu0 %v348
        %409 = vmatpush.msra.mxu0 %v346
        %410 = vmatpush.msra.mxu0 %v344
        %411 = vmatpush.msra.mxu0 %v342
        %412 = vmatpush.msra.mxu0 %v340
        %413 = vmatpush.msra.mxu0 %v338
        %414 = vmatpush.msra.mxu0 %v336
        %415 = vmatpush.msra.mxu0 %v334
        %416 = vmatmul.f32.gmra.mxu0 %v329
        %v417 = vpop.f32.mrf.mxu0
        %v418 = vadd.f32 %v368, %v417
        %419 = vmatmul.f32.gmra.mxu0 %v330
        %v420 = vpop.f32.mrf.mxu0
        %v421 = vadd.f32 %v368, %v420
        %422 = vmatmul.f32.gmra.mxu0 %v331
        %v423 = vpop.f32.mrf.mxu0
        %v424 = vadd.f32 %v368, %v423
        %425 = vmatmul.f32.gmra.mxu0 %v332
        %v426 = vpop.f32.mrf.mxu0
        %v427 = vadd.f32 %v368, %v426
        %428 = vdwg.mxu0
        %v429 = vmax.f32 %v389, 0.0
        %v430 = vmax.f32 %v418, 0.0
        %v431 = vmax.f32 %v392, 0.0
        %v432 = vmax.f32 %v421, 0.0
        %v433 = vmax.f32 %v395, 0.0
        %v434 = vmax.f32 %v424, 0.0
        %v435 = vmax.f32 %v398, 0.0
        %v436 = vmax.f32 %v427, 0.0
        %v437 = vld [vmem:[#allocation9] sm:$0xff]
        %v438 = vld [vmem:[#allocation9 + $0x8] sm:$0xff]
        %v439 = vld [vmem:[#allocation9 + $0x10] sm:$0xff]
        %v440 = vld [vmem:[#allocation9 + $0x18] sm:$0xff]
        %v441 = vld [vmem:[#allocation9 + $0x20] sm:$0xff]
        %v442 = vld [vmem:[#allocation9 + $0x28] sm:$0xff]
        %v443 = vld [vmem:[#allocation9 + $0x30] sm:$0xff]
        %v444 = vld [vmem:[#allocation9 + $0x38] sm:$0xff]
        %v445 = vld [vmem:[#allocation9 + $0x40] sm:$0xff]
        %v446 = vld [vmem:[#allocation9 + $0x48] sm:$0xff]
        %v447 = vld [vmem:[#allocation9 + $0x50] sm:$0xff]
        %v448 = vld [vmem:[#allocation9 + $0x58] sm:$0xff]
        %v449 = vld [vmem:[#allocation9 + $0x60] sm:$0xff]
        %v450 = vld [vmem:[#allocation9 + $0x68] sm:$0xff]
        %v451 = vld [vmem:[#allocation9 + $0x70] sm:$0xff]
        %v452 = vld [vmem:[#allocation9 + $0x78] sm:$0xff]
        %v453 = vld [vmem:[#allocation9 + $0x80] sm:$0xff]
        %v454 = vld [vmem:[#allocation9 + $0x88] sm:$0xff]
        %v455 = vld [vmem:[#allocation9 + $0x90] sm:$0xff]
        %v456 = vld [vmem:[#allocation9 + $0x98] sm:$0xff]
        %v457 = vld [vmem:[#allocation9 + $0xa0] sm:$0xff]
        %v458 = vld [vmem:[#allocation9 + $0xa8] sm:$0xff]
        %v459 = vld [vmem:[#allocation9 + $0xb0] sm:$0xff]
        %v460 = vld [vmem:[#allocation9 + $0xb8] sm:$0xff]
        %v461 = vld [vmem:[#allocation9 + $0xc0] sm:$0xff]
        %v462 = vld [vmem:[#allocation9 + $0xc8] sm:$0xff]
        %v463 = vld [vmem:[#allocation9 + $0xd0] sm:$0xff]
        %v464 = vld [vmem:[#allocation9 + $0xd8] sm:$0xff]
        %v465 = vld [vmem:[#allocation9 + $0xe0] sm:$0xff]
        %v466 = vld [vmem:[#allocation9 + $0xe8] sm:$0xff]
        %v467 = vld [vmem:[#allocation9 + $0xf0] sm:$0xff]
        %v468 = vld [vmem:[#allocation9 + $0xf8] sm:$0xff]
        %v469 = vld [vmem:[#allocation2] sm:$0xff]
        %v470 = vld [vmem:[#allocation2 + $0x8] sm:$0xff]
        %v471 = vld [vmem:[#allocation2 + $0x10] sm:$0xff]
        %v472 = vld [vmem:[#allocation2 + $0x18] sm:$0xff]
        %473 = vmatpush.msra.mxu0 %v452
        %474 = vmatpush.msra.mxu0 %v451
        %475 = vmatpush.msra.mxu0 %v450
        %476 = vmatpush.msra.mxu0 %v449
        %477 = vmatpush.msra.mxu0 %v448
        %478 = vmatpush.msra.mxu0 %v447
        %479 = vmatpush.msra.mxu0 %v446
        %480 = vmatpush.msra.mxu0 %v445
        %481 = vmatpush.msra.mxu0 %v444
        %482 = vmatpush.msra.mxu0 %v443
        %483 = vmatpush.msra.mxu0 %v442
        %484 = vmatpush.msra.mxu0 %v441
        %485 = vmatpush.msra.mxu0 %v440
        %486 = vmatpush.msra.mxu0 %v439
        %487 = vmatpush.msra.mxu0 %v438
        %488 = vmatpush.msra.mxu0 %v437
        %489 = vmatmul.f32.gmra.mxu0 %v429
        %v490 = vpop.f32.mrf.mxu0
        %v491 = vadd.f32 0.0, %v490
        %492 = vmatmul.f32.gmra.mxu0 %v431
        %v493 = vpop.f32.mrf.mxu0
        %v494 = vadd.f32 0.0, %v493
        %495 = vmatmul.f32.gmra.mxu0 %v433
        %v496 = vpop.f32.mrf.mxu0
        %v497 = vadd.f32 0.0, %v496
        %498 = vmatmul.f32.gmra.mxu0 %v435
        %v499 = vpop.f32.mrf.mxu0
        %v500 = vadd.f32 0.0, %v499
        %501 = vdwg.mxu0
        %502 = vmatpush.msra.mxu0 %v468
        %503 = vmatpush.msra.mxu0 %v467
        %504 = vmatpush.msra.mxu0 %v466
        %505 = vmatpush.msra.mxu0 %v465
        %506 = vmatpush.msra.mxu0 %v464
        %507 = vmatpush.msra.mxu0 %v463
        %508 = vmatpush.msra.mxu0 %v462
        %509 = vmatpush.msra.mxu0 %v461
        %510 = vmatpush.msra.mxu0 %v460
        %511 = vmatpush.msra.mxu0 %v459
        %512 = vmatpush.msra.mxu0 %v458
        %513 = vmatpush.msra.mxu0 %v457
        %514 = vmatpush.msra.mxu0 %v456
        %515 = vmatpush.msra.mxu0 %v455
        %516 = vmatpush.msra.mxu0 %v454
        %517 = vmatpush.msra.mxu0 %v453
        %518 = vmatmul.f32.gmra.mxu0 %v430
        %v519 = vpop.f32.mrf.mxu0
        %v520 = vadd.f32 %v491, %v519
        %521 = vmatmul.f32.gmra.mxu0 %v432
        %v522 = vpop.f32.mrf.mxu0
        %v523 = vadd.f32 %v494, %v522
        %524 = vmatmul.f32.gmra.mxu0 %v434
        %v525 = vpop.f32.mrf.mxu0
        %v526 = vadd.f32 %v497, %v525
        %527 = vmatmul.f32.gmra.mxu0 %v436
        %v528 = vpop.f32.mrf.mxu0
        %v529 = vadd.f32 %v500, %v528
        %530 = vdwg.mxu0
        %v531 = vadd.f32 %v469, %v520
        %v532 = vadd.f32 %v470, %v523
        %v533 = vadd.f32 %v471, %v526
        %v534 = vadd.f32 %v472, %v529
        %535 = vst [vmem:[#allocation2] sm:$0xff] %v531
        %536 = vst [vmem:[#allocation2 + $0x8] sm:$0xff] %v532
        %537 = vst [vmem:[#allocation2 + $0x10] sm:$0xff] %v533
        %538 = vst [vmem:[#allocation2 + $0x18] sm:$0xff] %v534
        // Predicated region
        $region65: #{tpu_custom_call.1} parent=39 // pred_check
          %p539 = pneg %p321
        $region66: #{tpu_custom_call.1} parent=39 // pred_check_branch
          %541 = sbr.rel (%p539) target = $region68
        $region67: #{tpu_custom_call.1} parent=39 // pred_region
          %v542 = vld [vmem:[#allocation11] sm:$0x7]
          %v543 = vld [vmem:[#allocation2] sm:$0xff]
          %v544 = vld [vmem:[#allocation2 + $0x8] sm:$0xff]
          %v545 = vld [vmem:[#allocation2 + $0x10] sm:$0xff]
          %v546 = vld [vmem:[#allocation2 + $0x18] sm:$0xff]
          %v547 = vperm.slane %v542, 0
          %v548 = vadd.f32 %v543, %v547
          %v549 = vadd.f32 %v544, %v547
          %v550 = vadd.f32 %v545, %v547
          %v551 = vadd.f32 %v546, %v547
          %v552 = vadd.f32 %v548, %v329
          %v553 = vadd.f32 %v549, %v330
          %v554 = vadd.f32 %v550, %v331
          %v555 = vadd.f32 %v551, %v332
          %556 = vadd.xlane.f32.xlu0 %v552
          %v557 = vpop.xlane.xlu0 %556
          %558 = vadd.xlane.f32.xlu0 %v553
          %v559 = vpop.xlane.xlu0 %558
          %560 = vadd.xlane.f32.xlu0 %v554
          %v561 = vpop.xlane.xlu0 %560
          %562 = vadd.xlane.f32.xlu0 %v555
          %v563 = vpop.xlane.xlu0 %562
          %v564 = vmul.f32 %v552, %v552
          %v565 = vmul.f32 %v553, %v553
          %v566 = vmul.f32 %v554, %v554
          %v567 = vmul.f32 %v555, %v555
          %568 = vadd.xlane.f32.xlu0 %v564
          %v569 = vpop.xlane.xlu0 %568
          %570 = vadd.xlane.f32.xlu0 %v565
          %v571 = vpop.xlane.xlu0 %570
          %572 = vadd.xlane.f32.xlu0 %v566
          %v573 = vpop.xlane.xlu0 %572
          %574 = vadd.xlane.f32.xlu0 %v567
          %v575 = vpop.xlane.xlu0 %574
          %v576 = vmul.f32 %v557, 0.0078125
          %v577 = vmul.f32 %v559, 0.0078125
          %v578 = vmul.f32 %v561, 0.0078125
          %v579 = vmul.f32 %v563, 0.0078125
          %v580 = vmul.f32 %v569, 0.0078125
          %v581 = vmul.f32 %v571, 0.0078125
          %v582 = vmul.f32 %v573, 0.0078125
          %v583 = vmul.f32 %v575, 0.0078125
          %v584 = vmul.f32 %v576, %v576
          %v585 = vmul.f32 %v577, %v577
          %v586 = vmul.f32 %v578, %v578
          %v587 = vmul.f32 %v579, %v579
          %v588 = vsub.f32 %v580, %v584
          %v589 = vsub.f32 %v581, %v585
          %v590 = vsub.f32 %v582, %v586
          %v591 = vsub.f32 %v583, %v587
          %v592 = vadd.f32 %v588, 1e-05
          %v593 = vadd.f32 %v589, 1e-05
          %v594 = vadd.f32 %v590, 1e-05
          %v595 = vadd.f32 %v591, 1e-05
          %v596 = vrsqrt.pop %v592
          %v597 = vmul.f32 %v596, %v592
          %v598 = vmul.f32 %v597, %v596
          %v599 = vmul.f32 0.5, %v598
          %v600 = vsub.f32 1.5, %v599
          %v601 = vmul.f32 %v596, %v600
          %vm602 = vweird.f32 %v592
          %vm603 = vweird.f32 %v596
          %vm604 = vmor %vm602, %vm603
          %v605 = vsel %vm604, %v596, %v601
          %v606 = vrsqrt.pop %v593
          %v607 = vmul.f32 %v606, %v593
          %v608 = vmul.f32 %v607, %v606
          %v609 = vmul.f32 0.5, %v608
          %v610 = vsub.f32 1.5, %v609
          %v611 = vmul.f32 %v606, %v610
          %vm612 = vweird.f32 %v593
          %vm613 = vweird.f32 %v606
          %vm614 = vmor %vm612, %vm613
          %v615 = vsel %vm614, %v606, %v611
          %v616 = vrsqrt.pop %v594
          %v617 = vmul.f32 %v616, %v594
          %v618 = vmul.f32 %v617, %v616
          %v619 = vmul.f32 0.5, %v618
          %v620 = vsub.f32 1.5, %v619
          %v621 = vmul.f32 %v616, %v620
          %vm622 = vweird.f32 %v594
          %vm623 = vweird.f32 %v616
          %vm624 = vmor %vm622, %vm623
          %v625 = vsel %vm624, %v616, %v621
          %v626 = vrsqrt.pop %v595
          %v627 = vmul.f32 %v626, %v595
          %v628 = vmul.f32 %v627, %v626
          %v629 = vmul.f32 0.5, %v628
          %v630 = vsub.f32 1.5, %v629
          %v631 = vmul.f32 %v626, %v630
          %vm632 = vweird.f32 %v595
          %vm633 = vweird.f32 %v626
          %vm634 = vmor %vm632, %vm633
          %v635 = vsel %vm634, %v626, %v631
          %v636 = vsub.f32 %v552, %v576
          %v637 = vsub.f32 %v553, %v577
          %v638 = vsub.f32 %v554, %v578
          %v639 = vsub.f32 %v555, %v579
          %v640 = vmul.f32 %v636, %v605
          %v641 = vmul.f32 %v637, %v615
          %v642 = vmul.f32 %v638, %v625
          %v643 = vmul.f32 %v639, %v635
          %v644 = vperm.slane %v542, 1
          %v645 = vmul.f32 %v640, %v644
          %v646 = vmul.f32 %v641, %v644
          %v647 = vmul.f32 %v642, %v644
          %v648 = vmul.f32 %v643, %v644
          %v649 = vperm.slane %v542, 2
          %v650 = vadd.f32 %v645, %v649
          %v651 = vadd.f32 %v646, %v649
          %v652 = vadd.f32 %v647, %v649
          %v653 = vadd.f32 %v648, %v649
          %654 = vst [vmem:[%s318] sm:$0xff] %v650
          %655 = vst [vmem:[%s318 + $0x8] sm:$0xff] %v651
          %656 = vst [vmem:[%s318 + $0x10] sm:$0xff] %v652
          %657 = vst [vmem:[%s318 + $0x18] sm:$0xff] %v653
        $region68: #{tpu_custom_call.1} parent=39 // pred_fallthru
          _
        %s658 = sand.u32 %s154, 1
        %s659 = scalar_lea.sflag [#allocation5], %s658
        %s660 = sand.u32 %s154, 1
        %s661 = smul.addr %s660, 32
        %s662 = scalar_lea.vmem [#allocation12], %s661
        // Predicated region
        $region69: #{tpu_custom_call.1} parent=39 // pred_check
          %p663 = pneg %p164
        $region70: #{tpu_custom_call.1} parent=39 // pred_check_branch
          %665 = sbr.rel (%p663) target = $region72
        $region71: #{tpu_custom_call.1} parent=39 // pred_region
          %s666 = smul.u32 4, %s28
          %668 = vsyncadd %s659, 0
          %s669 = smul.addr %s666, 8
          %s670 = scalar_lea.hbm %s5, %s669
          %s671 = sshll.u32 %s662, 4
          %s672 = int_to_ptr.vmem [resolvable:$true] %s671
          %s673 = sshll.u32 %s670, 4
          %s674 = int_to_ptr.hbm [resolvable:$true] %s673
          %679 = dma.vmem_to_hbm [thread:$0]  %s672, 512, %s674, %s659, 128, 128, 8
        $region72: #{tpu_custom_call.1} parent=39 // pred_fallthru
          _
      $region40: #{tpu_custom_call.1} parent=5 // pred_fallthru
        _
      %p680 = scmp.le.s32.totalorder 2, %s19
      // Predicated region
      $region73: #{tpu_custom_call.1} parent=5 // pred_check
        %p681 = pneg %p680
      $region74: #{tpu_custom_call.1} parent=5 // pred_check_branch
        %683 = sbr.rel (%p681) target = $region76
      $region75: #{tpu_custom_call.1} parent=5 // pred_region
        %s684 = ssub.s32 %s19, 2
        // Predicated region
        $region77: #{tpu_custom_call.1} parent=75 // pred_check
          %p685 = pneg %p170
        $region78: #{tpu_custom_call.1} parent=75 // pred_check_branch
          %687 = sbr.rel (%p685) target = $region80
        $region79: #{tpu_custom_call.1} parent=75 // pred_region
          %s688 = sand.u32 %s155, 1
          %s689 = scalar_lea.sflag [#allocation5], %s688
          %s690 = sand.u32 %s155, 1
          %s691 = smul.addr %s690, 32
          %s692 = scalar_lea.vmem [#allocation12], %s691
          %694 = dma.done %s689, 512
        $region80: #{tpu_custom_call.1} parent=75 // pred_fallthru
          _
      $region76: #{tpu_custom_call.1} parent=5 // pred_fallthru
        _
    $region6: #{tpu_custom_call.1} parent=1 // loop_footer
      %s23 = sadd.s32 1, %s19
    $region7: #{tpu_custom_call.1} parent=1 // loop_footer_branch
      %18 = sbr.rel target = $region3
    $region8: #{tpu_custom_call.1} parent=1 // loop_exit
      _
    %695 = vsyncpa [#allocation4], 1
    %s696 = scalar_lea.sflag [#allocation4], 1
    %697 = vsyncpa %s696, 1
    %698 = vsyncpa [#allocation7], 1
    %699 = vsyncpa [#allocation10], 1
    %700 = vsyncpa [#allocation5], 1
    %s701 = scalar_lea.sflag [#allocation5], 1
    %702 = vsyncpa %s701, 1

</llo_original>
